<compile_context>
chip_gen: v6e
topology: v6e:2x2x1
jax: 0.10.0
libtpu: 0.0.40
codegen_flags: <defaults>
</compile_context>

<pallas_src>
import math

import jax
import jax.numpy as jnp
from jax import lax
from jax.experimental import pallas as pl
from jax.experimental.pallas import tpu as pltpu

D_K = 64
D_V = 64
_SCALE = 1.0 / math.sqrt(D_K)  # = 0.125, exactly representable
_MASK_FILL = -1.0e9


# --------------------------------------------------------------------------
# Kernel body
# --------------------------------------------------------------------------
def _make_sdpa_kernel(mxu_dtype):
    def kernel(q_ref, k_ref, v_ref, mask_ref, ctx_ref, attn_ref):
        # q_ref: (bhb, tq, Dk)   k_ref: (bhb, Lk, Dk)   v_ref: (bhb, Lk, Dv)
        # mask_ref: (bhb, tq|1, Lk) int8
        # ctx_ref: (bhb, tq, Dv) attn_ref: (bhb, tq, Lk)
        q = q_ref[...]
        k = k_ref[...]
        v = v_ref[...]
        m = mask_ref[...]

        # Fold 1/sqrt(d_k) into Q (O(Lq*Dk) multiply instead of O(Lq*Lk)).
        q = q * jnp.asarray(_SCALE, dtype=q.dtype)
        if mxu_dtype is not None:
            q = q.astype(mxu_dtype)
            k = k.astype(mxu_dtype)

        # scores = Q @ K^T: contract the feature axis of BOTH operands so no
        # explicit K transpose/relayout is needed; f32 accumulation on the MXU.
        scores = lax.dot_general(
            q, k,
            dimension_numbers=(((2,), (2,)), ((0,), (0,))),
            preferred_element_type=jnp.float32,
        )

        # masked_fill_(attn_mask, -1e9); (bhb,1,Lk) masks broadcast over tq.
        scores = jnp.where(m != 0, jnp.float32(_MASK_FILL), scores)

        # Numerically stable softmax along the key axis (matches torch).
        s_max = jnp.max(scores, axis=-1, keepdims=True)
        e = jnp.exp(scores - s_max)
        denom = jnp.sum(e, axis=-1, keepdims=True)
        attn = e * pl.reciprocal(denom, approx=False)  # exact: attn is returned

        # context = attn @ V (probabilities cast to the MXU dtype, f32 acc).
        pv_dtype = v_ref.dtype if mxu_dtype is None else mxu_dtype
        ctx = lax.dot_general(
            attn.astype(pv_dtype), v.astype(pv_dtype),
            dimension_numbers=(((2,), (1,)), ((0,), (0,))),
            preferred_element_type=jnp.float32,
        )

        ctx_ref[...] = ctx.astype(ctx_ref.dtype)
        attn_ref[...] = attn.astype(attn_ref.dtype)

    return kernel


# --------------------------------------------------------------------------
# Chip-aware sizing helpers
# --------------------------------------------------------------------------
def _chip_info():
    """(num_tensorcores_per_chip, vmem_capacity_bytes) with safe fallbacks."""
    num_cores = 1
    vmem_cap = 128 * 1024 * 1024
    try:
        kind = jax.devices()[0].device_kind.lower()
    except Exception:  # pragma: no cover - defensive
        kind = ""
    if "v7" in kind or "tpu7" in kind:
        num_cores = 2
        vmem_cap = 64 * 1024 * 1024
    try:
        info = pltpu.get_tpu_info()
        cap = int(getattr(info, "vmem_capacity_bytes", 0))
        if cap > 0:
            vmem_cap = cap
    except Exception:  # pragma: no cover - defensive
        pass
    return num_cores, vmem_cap


def _vmem_budget(vmem_cap):
    """(vmem_limit_bytes for the compiler, tile-sizing budget in bytes)."""
    if vmem_cap <= 64 * 1024 * 1024:          # v7x: 64 MiB per TensorCore
        vmem_limit = min(vmem_cap * 3 // 4, 48 * 1024 * 1024)
        budget = min(vmem_cap * 9 // 16, 36 * 1024 * 1024)
    else:                                      # v5e / v6e: 128 MiB physical
        vmem_limit = 100 * 1024 * 1024
        budget = 72 * 1024 * 1024
    return vmem_limit, budget


def _tile_bytes(shape, dtype):
    """VMEM footprint of one tile, rounding to the chip's min tiling."""
    isz = jnp.dtype(dtype).itemsize
    sub_mult = max(8, 32 // isz)               # f32:8, bf16:16, int8:32 sublanes
    lead = 1
    for d in shape[:-2]:
        lead *= d
    sub = -(-shape[-2] // sub_mult) * sub_mult
    lane = -(-shape[-1] // 128) * 128
    return lead * sub * lane * isz


def _vmem_usage(bhb, tq, mask_lq, Lk, Dk, Dv, in_dtype, out_dtype):
    tiles = (
        _tile_bytes((bhb, tq, Dk), in_dtype)          # Q
        + _tile_bytes((bhb, Lk, Dk), in_dtype)        # K
        + _tile_bytes((bhb, Lk, Dv), in_dtype)        # V
        + _tile_bytes((bhb, mask_lq, Lk), jnp.int8)   # mask
        + _tile_bytes((bhb, tq, Dv), out_dtype)       # ctx out
        + _tile_bytes((bhb, tq, Lk), out_dtype)       # attn out
    )
    # f32 temporaries (scores, exp, probs) + f32 ctx accumulator: NOT
    # pipeline double-buffered, so counted once.
    temps = 3 * _tile_bytes((bhb, tq, Lk), jnp.float32) \
        + _tile_bytes((bhb, tq, Dv), jnp.float32)
    return 2 * tiles + temps                   # x2: BlockSpec double buffering


def _divisors(n):
    return [d for d in range(1, n + 1) if n % d == 0]


def _pick_tiles(BH, Lq, Lk, Dk, Dv, in_dtype, out_dtype, mask_per_query,
                budget, num_cores, force_tq=None):
    """Choose (bhb, tq): head-block and query-tile sizes."""
    def usage(bhb, tq):
        mlq = tq if mask_per_query else 1
        return _vmem_usage(bhb, tq, mlq, Lk, Dk, Dv, in_dtype, out_dtype)

    if force_tq is not None:
        tq = int(force_tq)
        assert Lq % tq == 0 and (tq % 8 == 0 or tq == Lq), "invalid forced tq"
    else:
        # Prefer the full query extent; otherwise largest multiple-of-8 divisor.
        tq_cands = [Lq] + sorted(
            [d for d in _divisors(Lq) if d % 8 == 0 and d != Lq], reverse=True)
        tq = tq_cands[-1]
        for cand in tq_cands:
            if usage(1, cand) <= budget:
                tq = cand
                break

    nq = Lq // tq
    fitting = [d for d in _divisors(BH) if usage(d, tq) <= budget] or [1]

    if num_cores > 1:
        # 2-TC (v7x): prefer a grid that splits evenly over both cores and
        # still leaves >= 2 iterations per core for pipelining.
        def steps(bhb):
            return (BH // bhb) * nq
        pref1 = [d for d in fitting
                 if steps(d) % num_cores == 0 and steps(d) >= 2 * num_cores]
        pref2 = [d for d in fitting if steps(d) >= num_cores]
        bhb = max(pref1) if pref1 else (max(pref2) if pref2 else max(fitting))
    else:
        # Single-TC (v5e/v6e): the grid is a serial loop, so always take the
        # largest VMEM-fitting block.
        bhb = max(fitting)
    return bhb, tq


# --------------------------------------------------------------------------
# Public wrapper
# --------------------------------------------------------------------------
def scaled_dot_product_attention(Q, K, V, attn_mask, *, mxu_dtype=None,
                                 _force_tq=None):
    """Q: [B,H,Lq,Dk], K: [B,H,Lk,Dk], V: [B,H,Lk,Dv],
    attn_mask: [B,H,Lq,Lk] or [B,H,1,Lk] (bool/int; True = mask out).
    mxu_dtype: optionally run the matmuls in bf16 (relax tolerances if used).
    Returns (context [B,H,Lq,Dv], attn [B,H,Lq,Lk])."""
    B, H, Lq, Dk = Q.shape
    Lk = K.shape[2]
    Dv = V.shape[3]
    BH = B * H
    out_dtype = Q.dtype

    q = Q.reshape(BH, Lq, Dk)
    k = K.reshape(BH, Lk, Dk)
    v = V.reshape(BH, Lk, Dv)

    # int8 mask (4x less DMA than int32).  A key-padding mask (Lq dim == 1)
    # stays compact and is broadcast in-kernel: Lq x less mask traffic.
    mask_lq = attn_mask.shape[2]
    attn_mask = jnp.broadcast_to(attn_mask, (B, H, mask_lq, Lk))
    m = attn_mask.reshape(BH, mask_lq, Lk).astype(jnp.int8)
    mask_per_query = mask_lq != 1

    num_cores, vmem_cap = _chip_info()
    vmem_limit, budget = _vmem_budget(vmem_cap)
    bhb, tq = _pick_tiles(BH, Lq, Lk, Dk, Dv, q.dtype, out_dtype,
                          mask_per_query, budget, num_cores, force_tq=_force_tq)
    nb, nq = BH // bhb, Lq // tq

    mlq_blk = tq if mask_per_query else 1

    def mask_idx(b, qi):
        return (b, qi, 0) if mask_per_query else (b, 0, 0)

    grid_spec = pltpu.PrefetchScalarGridSpec(
        num_scalar_prefetch=0,
        grid=(nb, nq),
        in_specs=[
            pl.BlockSpec((bhb, tq, Dk), lambda b, qi: (b, qi, 0)),
            pl.BlockSpec((bhb, Lk, Dk), lambda b, qi: (b, 0, 0)),
            pl.BlockSpec((bhb, Lk, Dv), lambda b, qi: (b, 0, 0)),
            pl.BlockSpec((bhb, mlq_blk, Lk), mask_idx),
        ],
        out_specs=[
            pl.BlockSpec((bhb, tq, Dv), lambda b, qi: (b, qi, 0)),
            pl.BlockSpec((bhb, tq, Lk), lambda b, qi: (b, qi, 0)),
        ],
    )

    in_isz = jnp.dtype(q.dtype).itemsize
    out_isz = jnp.dtype(out_dtype).itemsize
    flops = 2 * BH * Lq * Lk * (Dk + Dv)
    transcendentals = BH * Lq * Lk
    bytes_accessed = (
        (q.size + k.size + v.size) * in_isz
        + m.size  # int8
        + (BH * Lq * Dv + BH * Lq * Lk) * out_isz
    )

    ctx, attn = pl.pallas_call(
        _make_sdpa_kernel(mxu_dtype),
        out_shape=(
            jax.ShapeDtypeStruct((BH, Lq, Dv), out_dtype),
            jax.ShapeDtypeStruct((BH, Lq, Lk), out_dtype),
        ),
        grid_spec=grid_spec,
        compiler_params=pltpu.CompilerParams(
            dimension_semantics=("parallel", "parallel"),
            vmem_limit_bytes=int(vmem_limit),
        ),
        cost_estimate=pl.CostEstimate(
            flops=int(flops),
            transcendentals=int(transcendentals),
            bytes_accessed=int(bytes_accessed),
        ),
    )(q, k, v, m)

    return ctx.reshape(B, H, Lq, Dv), attn.reshape(B, H, Lq, Lk)


# --------------------------------------------------------------------------
# Reference + self-test
# --------------------------------------------------------------------------
def _reference(Q, K, V, attn_mask):
    scores = jnp.einsum("bhqd,bhkd->bhqk", Q, K) * _SCALE
    scores = jnp.where(attn_mask, _MASK_FILL, scores)
    attn = jax.nn.softmax(scores, axis=-1)
    ctx = jnp.einsum("bhqk,bhkd->bhqd", attn, V)
    return ctx, attn


if __name__ == "__main__":
    # Small shapes consistent with the module: d_k = d_v = 64.
    B, H, Lq, Lk = 2, 2, 8, 8

    key = jax.random.PRNGKey(0)
    kq, kk, kv = jax.random.split(key, 3)
    Q = jax.random.normal(kq, (B, H, Lq, D_K), dtype=jnp.float32)
    K = jax.random.normal(kk, (B, H, Lk, D_K), dtype=jnp.float32)
    V = jax.random.normal(kv, (B, H, Lk, D_V), dtype=jnp.float32)
    # Boolean padding-style mask (deterministic): mask out the last two keys.
    attn_mask = jnp.zeros((B, H, Lq, Lk), dtype=bool).at[:, :, :, Lk - 2:].set(True)

    ctx, attn = scaled_dot_product_attention(Q, K, V, attn_mask)
    jax.block_until_ready((ctx, attn))
    ctx_ref, attn_ref = _reference(Q, K, V, attn_mask)
    assert jnp.allclose(ctx, ctx_ref, atol=1e-4, rtol=1e-4)
    assert jnp.allclose(attn, attn_ref, atol=1e-5, rtol=1e-5)

    # Compact key-padding-mask path (mask constant over the query axis).
    pad_mask = attn_mask[:, :, :1, :]
    ctx2, attn2 = scaled_dot_product_attention(Q, K, V, pad_mask)
    jax.block_until_ready((ctx2, attn2))
    assert jnp.allclose(ctx2, ctx_ref, atol=1e-4, rtol=1e-4)
    assert jnp.allclose(attn2, attn_ref, atol=1e-5, rtol=1e-5)

    # Query-tiled path (nq > 1): force a tq smaller than Lq.
    Lq2, Lk2 = 16, 8
    kq2, kk2, kv2 = jax.random.split(jax.random.PRNGKey(1), 3)
    Q2 = jax.random.normal(kq2, (B, H, Lq2, D_K), dtype=jnp.float32)
    K2 = jax.random.normal(kk2, (B, H, Lk2, D_K), dtype=jnp.float32)
    V2 = jax.random.normal(kv2, (B, H, Lk2, D_V), dtype=jnp.float32)
    mask2 = jnp.zeros((B, H, Lq2, Lk2), dtype=bool).at[:, :, :, Lk2 - 1:].set(True)
    ctx3, attn3 = scaled_dot_product_attention(Q2, K2, V2, mask2, _force_tq=8)
    jax.block_until_ready((ctx3, attn3))
    ctx3_ref, attn3_ref = _reference(Q2, K2, V2, mask2)
    assert jnp.allclose(ctx3, ctx3_ref, atol=1e-4, rtol=1e-4)
    assert jnp.allclose(attn3, attn3_ref, atol=1e-5, rtol=1e-5)

    print("KERNEL_OK")
</pallas_src>

<mosaic_0001>
module attributes {stable_mosaic.version = 11 : i64} {
  func.func @kernel(%arg0: i32, %arg1: i32, %arg2: memref<4x8x64xf32, #tpu.memory_space<vmem>>, %arg3: memref<4x8x64xf32, #tpu.memory_space<vmem>>, %arg4: memref<4x8x64xf32, #tpu.memory_space<vmem>>, %arg5: memref<4x8x8xi8, #tpu.memory_space<vmem>>, %arg6: memref<4x8x64xf32, #tpu.memory_space<vmem>>, %arg7: memref<4x8x8xf32, #tpu.memory_space<vmem>>) attributes {dimension_semantics = [#tpu.dimension_semantics<parallel>, #tpu.dimension_semantics<parallel>], iteration_bounds = array<i64: 1, 1>, scalar_prefetch = 0 : i64, scratch_operands = 0 : i64, tpu.core_type = #tpu.core_type<tc>, window_params = [{transform_indices = @transform_0, window_bounds = array<i64: 4, 8, 64>}, {transform_indices = @transform_1, window_bounds = array<i64: 4, 8, 64>}, {transform_indices = @transform_2, window_bounds = array<i64: 4, 8, 64>}, {transform_indices = @transform_3, window_bounds = array<i64: 4, 8, 8>}, {transform_indices = @transform_4, window_bounds = array<i64: 4, 8, 64>}, {transform_indices = @transform_5, window_bounds = array<i64: 4, 8, 8>}]} {
    %c0 = arith.constant 0 : index
    %c0_0 = arith.constant 0 : index
    %c0_1 = arith.constant 0 : index
    %0 = vector.load %arg2[%c0, %c0_0, %c0_1] : memref<4x8x64xf32, #tpu.memory_space<vmem>>, vector<4x8x64xf32>
    %c0_2 = arith.constant 0 : index
    %c0_3 = arith.constant 0 : index
    %c0_4 = arith.constant 0 : index
    %1 = vector.load %arg3[%c0_2, %c0_3, %c0_4] : memref<4x8x64xf32, #tpu.memory_space<vmem>>, vector<4x8x64xf32>
    %c0_5 = arith.constant 0 : index
    %c0_6 = arith.constant 0 : index
    %c0_7 = arith.constant 0 : index
    %2 = vector.load %arg4[%c0_5, %c0_6, %c0_7] : memref<4x8x64xf32, #tpu.memory_space<vmem>>, vector<4x8x64xf32>
    %c0_8 = arith.constant 0 : index
    %c0_9 = arith.constant 0 : index
    %c0_10 = arith.constant 0 : index
    %3 = vector.load %arg5[%c0_8, %c0_9, %c0_10] : memref<4x8x8xi8, #tpu.memory_space<vmem>>, vector<4x8x8xi8>
    %cst = arith.constant 1.250000e-01 : f32
    %4 = vector.broadcast %cst : f32 to vector<4x8x64xf32>
    %5 = arith.mulf %0, %4 : vector<4x8x64xf32>
    %cst_11 = arith.constant dense<0.000000e+00> : vector<4x8x8xf32>
    %6 = tpu.matmul %5, %1, %cst_11 {dimension_numbers = #tpu.dot_dimension_numbers<[2], [2], [1], [1], [0, 0, 0, 1, 1, 1], [0], [0]>} : vector<4x8x64xf32>, vector<4x8x64xf32>, vector<4x8x8xf32> -> vector<4x8x8xf32>
    %c0_i8 = arith.constant 0 : i8
    %7 = vector.broadcast %c0_i8 : i8 to vector<4x8x8xi8>
    %8 = arith.cmpi ne, %3, %7 : vector<4x8x8xi8>
    %cst_12 = arith.constant -1.000000e+09 : f32
    %9 = vector.broadcast %cst_12 : f32 to vector<4x8x8xf32>
    %10 = arith.select %8, %9, %6 : vector<4x8x8xi1>, vector<4x8x8xf32>
    %cst_13 = arith.constant dense<0xFF800000> : vector<4x8xf32>
    %11 = vector.multi_reduction <maximumf>, %10, %cst_13 [2] : vector<4x8x8xf32> to vector<4x8xf32>
    %12 = vector.shape_cast %11 : vector<4x8xf32> to vector<4x8x1xf32>
    %13 = vector.broadcast %12 : vector<4x8x1xf32> to vector<4x8x8xf32>
    %14 = arith.subf %10, %13 : vector<4x8x8xf32>
    %15 = math.exp %14 : vector<4x8x8xf32>
    %cst_14 = arith.constant dense<0.000000e+00> : vector<4x8xf32>
    %16 = vector.multi_reduction <add>, %15, %cst_14 [2] : vector<4x8x8xf32> to vector<4x8xf32>
    %17 = vector.shape_cast %16 : vector<4x8xf32> to vector<4x8x1xf32>
    %18 = tpu.reciprocal %17 : vector<4x8x1xf32> -> vector<4x8x1xf32>
    %19 = vector.broadcast %18 : vector<4x8x1xf32> to vector<4x8x8xf32>
    %20 = arith.mulf %15, %19 : vector<4x8x8xf32>
    %cst_15 = arith.constant dense<0.000000e+00> : vector<4x8x64xf32>
    %21 = tpu.matmul %20, %2, %cst_15 {dimension_numbers = #tpu.dot_dimension_numbers<[2], [1], [1], [2], [0, 0, 0, 1, 1, 2], [0], [0]>} : vector<4x8x8xf32>, vector<4x8x64xf32>, vector<4x8x64xf32> -> vector<4x8x64xf32>
    %c0_16 = arith.constant 0 : index
    %c0_17 = arith.constant 0 : index
    %c0_18 = arith.constant 0 : index
    %22 = vector.load %arg6[%c0_16, %c0_17, %c0_18] : memref<4x8x64xf32, #tpu.memory_space<vmem>>, vector<4x8x64xf32>
    tpu.vector_store %arg6[%c0_16, %c0_17, %c0_18], %21 {strides = array<i32>} : memref<4x8x64xf32, #tpu.memory_space<vmem>>, vector<4x8x64xf32>,
    %c0_19 = arith.constant 0 : index
    %c0_20 = arith.constant 0 : index
    %c0_21 = arith.constant 0 : index
    %23 = vector.load %arg7[%c0_19, %c0_20, %c0_21] : memref<4x8x8xf32, #tpu.memory_space<vmem>>, vector<4x8x8xf32>
    tpu.vector_store %arg7[%c0_19, %c0_20, %c0_21], %20 {strides = array<i32>} : memref<4x8x8xf32, #tpu.memory_space<vmem>>, vector<4x8x8xf32>,
    return
  }
  func.func @transform_0(%arg0: i32, %arg1: i32) -> (i32, i32, i32) {
    %c0_i32 = arith.constant 0 : i32
    %c0_i32_0 = arith.constant 0 : i32
    return %arg0, %arg1, %c0_i32 : i32, i32, i32
  }
  func.func @transform_1(%arg0: i32, %arg1: i32) -> (i32, i32, i32) {
    %c0_i32 = arith.constant 0 : i32
    %c0_i32_0 = arith.constant 0 : i32
    %c0_i32_1 = arith.constant 0 : i32
    return %arg0, %c0_i32, %c0_i32_0 : i32, i32, i32
  }
  func.func @transform_2(%arg0: i32, %arg1: i32) -> (i32, i32, i32) {
    %c0_i32 = arith.constant 0 : i32
    %c0_i32_0 = arith.constant 0 : i32
    %c0_i32_1 = arith.constant 0 : i32
    return %arg0, %c0_i32, %c0_i32_0 : i32, i32, i32
  }
  func.func @transform_3(%arg0: i32, %arg1: i32) -> (i32, i32, i32) {
    %c0_i32 = arith.constant 0 : i32
    %c0_i32_0 = arith.constant 0 : i32
    return %arg0, %arg1, %c0_i32 : i32, i32, i32
  }
  func.func @transform_4(%arg0: i32, %arg1: i32) -> (i32, i32, i32) {
    %c0_i32 = arith.constant 0 : i32
    %c0_i32_0 = arith.constant 0 : i32
    return %arg0, %arg1, %c0_i32 : i32, i32, i32
  }
  func.func @transform_5(%arg0: i32, %arg1: i32) -> (i32, i32, i32) {
    %c0_i32 = arith.constant 0 : i32
    %c0_i32_0 = arith.constant 0 : i32
    return %arg0, %arg1, %c0_i32 : i32, i32, i32
  }
}

</mosaic_0001>

<llo_original>
// kernel: tpu_custom_call.1
$region0: #{tpu_custom_call.1}
  #allocation0 [shape = 'u32[]', space=smem, size = 0x4, offset = 0x4, fixed_abs, tag = 'smem constant byte address 0x4 - core index']
  #allocation1 [shape = 'u32[144,128]{1,0:T(1,128)}', space=vmem, size = 0x12000, scoped, tag = 'internal scratch']
  %s0 = inlined_call_operand.hbm [shape: f32[4,8,64], index: 0, kind: input, shape index: {}]
  %s1 = inlined_call_operand.hbm [shape: f32[4,8,64], index: 1, kind: input, shape index: {}]
  %s2 = inlined_call_operand.hbm [shape: f32[4,8,64], index: 2, kind: input, shape index: {}]
  %s3 = inlined_call_operand.hbm [shape: s8[4,8,8], index: 3, kind: input, shape index: {}]
  %s4 = inlined_call_operand.hbm [shape: f32[4,8,64], index: 4, kind: output, shape index: {0}]
  %s5 = inlined_call_operand.hbm [shape: f32[4,8,8], index: 5, kind: output, shape index: {1}]
  %6 = xla_tuple %s4, %s5
  %s7 = sld [smem:[#allocation0]]
  $region50: #{tpu_custom_call.1} parent=0
    _
  %s9 = ssub.s32 1, %s7
  %s10 = scalar_select 0, %s9, %s7
  $region1: #{tpu_custom_call.1} parent=0
    #allocation2 [shape = 'u8[16384]{0}', space=vmem, size = 0x4000, scoped, tag = 'input window, operand 0, single buffered']
    #allocation3 [shape = 's32[1]{0}', space=sflag, size = 0x4, scoped, tag = 'scoped memory for tpu_custom_call.1']
    #allocation4 [shape = 's32[1]{0}', space=sflag, size = 0x4, scoped, tag = 'scoped memory for tpu_custom_call.1']
    #allocation5 [shape = 'u8[16384]{0}', space=vmem, size = 0x4000, scoped, tag = 'input window, operand 1, single buffered']
    #allocation6 [shape = 's32[1]{0}', space=sflag, size = 0x4, scoped, tag = 'scoped memory for tpu_custom_call.1']
    #allocation7 [shape = 'u8[16384]{0}', space=vmem, size = 0x4000, scoped, tag = 'input window, operand 2, single buffered']
    #allocation8 [shape = 'u8[4096]{0}', space=vmem, size = 0x1000, scoped, tag = 'input window, operand 3, single buffered']
    #allocation9 [shape = 's32[1]{0}', space=sflag, size = 0x4, scoped, tag = 'scoped memory for tpu_custom_call.1']
    #allocation10 [shape = 'u8[16384]{0}', space=vmem, size = 0x4000, scoped, tag = 'output window, operand 0, single buffered']
    #allocation11 [shape = 'u8[16384]{0}', space=vmem, size = 0x4000, scoped, tag = 'output window, operand 1, single buffered']
    #allocation12 [shape = 's32[1]{0}', space=sflag, size = 0x4, scoped, tag = 'scoped memory for tpu_custom_call.1']
    %11 = vsyncpa [#allocation3], 0
    %12 = vsyncpa [#allocation6], 0
    %13 = vsyncpa [#allocation9], 0
    %14 = vsyncpa [#allocation4], 0
    %15 = vsyncpa [#allocation12], 0
    // Predicated region
    $region2: #{tpu_custom_call.1} parent=1 // pred_check
      _
    $region3: #{tpu_custom_call.1} parent=1 // pred_check_branch
      %17 = sbr.rel (0) target = $region5
    $region4: #{tpu_custom_call.1} parent=1 // pred_region
      %s19 = ssub.s32 512, 512
      %20 = vsyncadd [#allocation3], %s19
      %s21 = sshll.u32 [#allocation2], 4
      %s22 = int_to_ptr.vmem [resolvable:$true] %s21
      %27 = dma.hbm_to_vmem [thread:$0]  %s0, 512, %s22, [#allocation3], 128, 128, 8
    $region5: #{tpu_custom_call.1} parent=1 // pred_fallthru
      _
    // Predicated region
    $region6: #{tpu_custom_call.1} parent=1 // pred_check
      _
    $region7: #{tpu_custom_call.1} parent=1 // pred_check_branch
      %29 = sbr.rel (0) target = $region9
    $region8: #{tpu_custom_call.1} parent=1 // pred_region
      %s31 = ssub.s32 512, 512
      %32 = vsyncadd [#allocation6], %s31
      %s33 = sshll.u32 [#allocation5], 4
      %s34 = int_to_ptr.vmem [resolvable:$true] %s33
      %39 = dma.hbm_to_vmem [thread:$0]  %s1, 512, %s34, [#allocation6], 128, 128, 8
    $region9: #{tpu_custom_call.1} parent=1 // pred_fallthru
      _
    // Predicated region
    $region10: #{tpu_custom_call.1} parent=1 // pred_check
      _
    $region11: #{tpu_custom_call.1} parent=1 // pred_check_branch
      %41 = sbr.rel (0) target = $region13
    $region12: #{tpu_custom_call.1} parent=1 // pred_region
      %s43 = ssub.s32 512, 512
      %44 = vsyncadd [#allocation6], %s43
      %s45 = sshll.u32 [#allocation7], 4
      %s46 = int_to_ptr.vmem [resolvable:$true] %s45
      %51 = dma.hbm_to_vmem [thread:$0]  %s2, 512, %s46, [#allocation6], 128, 128, 8
    $region13: #{tpu_custom_call.1} parent=1 // pred_fallthru
      _
    // Predicated region
    $region14: #{tpu_custom_call.1} parent=1 // pred_check
      _
    $region15: #{tpu_custom_call.1} parent=1 // pred_check_branch
      %53 = sbr.rel (0) target = $region17
    $region16: #{tpu_custom_call.1} parent=1 // pred_region
      %s55 = ssub.s32 128, 128
      %56 = vsyncadd [#allocation9], %s55
      %s57 = sshll.u32 [#allocation8], 4
      %s58 = int_to_ptr.vmem [resolvable:$true] %s57
      %63 = dma.hbm_to_vmem [thread:$0]  %s3, 128, %s58, [#allocation9], 32, 32, 2
    $region17: #{tpu_custom_call.1} parent=1 // pred_fallthru
      _
    // Predicated region
    $region18: #{tpu_custom_call.1} parent=1 // pred_check
      _
    $region19: #{tpu_custom_call.1} parent=1 // pred_check_branch
      %65 = sbr.rel (0) target = $region21
    $region20: #{tpu_custom_call.1} parent=1 // pred_region
      %66 = dma.done [#allocation3], 512
    $region21: #{tpu_custom_call.1} parent=1 // pred_fallthru
      _
    // Predicated region
    $region22: #{tpu_custom_call.1} parent=1 // pred_check
      _
    $region23: #{tpu_custom_call.1} parent=1 // pred_check_branch
      %68 = sbr.rel (0) target = $region25
    $region24: #{tpu_custom_call.1} parent=1 // pred_region
      %69 = dma.done [#allocation6], 512
    $region25: #{tpu_custom_call.1} parent=1 // pred_fallthru
      _
    // Predicated region
    $region26: #{tpu_custom_call.1} parent=1 // pred_check
      _
    $region27: #{tpu_custom_call.1} parent=1 // pred_check_branch
      %71 = sbr.rel (0) target = $region29
    $region28: #{tpu_custom_call.1} parent=1 // pred_region
      %72 = dma.done [#allocation6], 512
    $region29: #{tpu_custom_call.1} parent=1 // pred_fallthru
      _
    // Predicated region
    $region30: #{tpu_custom_call.1} parent=1 // pred_check
      _
    $region31: #{tpu_custom_call.1} parent=1 // pred_check_branch
      %74 = sbr.rel (0) target = $region33
    $region32: #{tpu_custom_call.1} parent=1 // pred_region
      %75 = dma.done [#allocation9], 128
    $region33: #{tpu_custom_call.1} parent=1 // pred_fallthru
      _
    %v78 = vld [vmem:[#allocation2] sm:$0xff]
    %v79 = vld [vmem:[#allocation2 + $0x8] sm:$0xff]
    %v80 = vld [vmem:[#allocation2 + $0x10] sm:$0xff]
    %v81 = vld [vmem:[#allocation2 + $0x18] sm:$0xff]
    %v82 = vld [vmem:[#allocation5] sm:$0xff]
    %v83 = vld [vmem:[#allocation5 + $0x8] sm:$0xff]
    %v84 = vld [vmem:[#allocation5 + $0x10] sm:$0xff]
    %v85 = vld [vmem:[#allocation5 + $0x18] sm:$0xff]
    %v86 = vld [vmem:[#allocation7] sm:$0xff]
    %v87 = vld [vmem:[#allocation7 + $0x8] sm:$0xff]
    %v88 = vld [vmem:[#allocation7 + $0x10] sm:$0xff]
    %v89 = vld [vmem:[#allocation7 + $0x18] sm:$0xff]
    %v90 = vld [vmem:[#allocation8] sm:$0x3]
    %v91 = vld [vmem:[#allocation8 + $0x2] sm:$0x3]
    %v92 = vld [vmem:[#allocation8 + $0x4] sm:$0x3]
    %v93 = vld [vmem:[#allocation8 + $0x6] sm:$0x3]
    %v94 = vmul.f32 %v78, 0.125
    %v95 = vmul.f32 %v79, 0.125
    %v96 = vmul.f32 %v80, 0.125
    %v97 = vmul.f32 %v81, 0.125
    %vm98 = vcmask 523264
    %v100 = vsel %vm98, %v94, 0
    %v103 = vsel %vm98, %v82, 0
    %105 = vmatprep.subr.mxu0 0.0
    %106 = vmatpush1.xpose.msra.mxu0 0.0
    %107 = vmatprep.subr.mxu0 0.0
    %108 = vmatpush1.xpose.msra.mxu0 0.0
    %109 = vmatprep.subr.mxu0 0.0
    %110 = vmatpush1.xpose.msra.mxu0 0.0
    %111 = vmatprep.subr.mxu0 0.0
    %112 = vmatpush1.xpose.msra.mxu0 0.0
    %113 = vmatprep.subr.mxu0 0.0
    %114 = vmatpush1.xpose.msra.mxu0 0.0
    %115 = vmatprep.subr.mxu0 0.0
    %116 = vmatpush1.xpose.msra.mxu0 0.0
    %117 = vmatprep.subr.mxu0 0.0
    %118 = vmatpush1.xpose.msra.mxu0 0.0
    %119 = vmatprep.subr.mxu0 0.0
    %120 = vmatpush1.xpose.msra.mxu0 0.0
    %121 = vmatprep.subr.mxu0 0.0
    %122 = vmatpush1.xpose.msra.mxu0 0.0
    %123 = vmatprep.subr.mxu0 0.0
    %124 = vmatpush1.xpose.msra.mxu0 0.0
    %125 = vmatprep.subr.mxu0 0.0
    %126 = vmatpush1.xpose.msra.mxu0 0.0
    %127 = vmatprep.subr.mxu0 0.0
    %128 = vmatpush1.xpose.msra.mxu0 0.0
    %129 = vmatprep.subr.mxu0 0.0
    %130 = vmatpush1.xpose.msra.mxu0 0.0
    %131 = vmatprep.subr.mxu0 0.0
    %132 = vmatpush1.xpose.msra.mxu0 0.0
    %133 = vmatprep.subr.mxu0 0.0
    %134 = vmatpush1.xpose.msra.mxu0 0.0
    %135 = vmatprep.subr.mxu0 0.0
    %136 = vmatpush1.xpose.msra.mxu0 %v103
    %137 = vmatprep.subr.mxu0 0.0
    %138 = vmatpush2.xpose.msra.mxu0 0.0
    %139 = vmatprep.subr.mxu0 0.0
    %140 = vmatpush2.xpose.msra.mxu0 0.0
    %141 = vmatprep.subr.mxu0 0.0
    %142 = vmatpush2.xpose.msra.mxu0 0.0
    %143 = vmatprep.subr.mxu0 0.0
    %144 = vmatpush2.xpose.msra.mxu0 0.0
    %145 = vmatprep.subr.mxu0 0.0
    %146 = vmatpush2.xpose.msra.mxu0 0.0
    %147 = vmatprep.subr.mxu0 0.0
    %148 = vmatpush2.xpose.msra.mxu0 0.0
    %149 = vmatprep.subr.mxu0 0.0
    %150 = vmatpush2.xpose.msra.mxu0 0.0
    %151 = vmatprep.subr.mxu0 0.0
    %152 = vmatpush2.xpose.msra.mxu0 0.0
    %153 = vmatprep.subr.mxu0 0.0
    %154 = vmatpush2.xpose.msra.mxu0 0.0
    %155 = vmatprep.subr.mxu0 0.0
    %156 = vmatpush2.xpose.msra.mxu0 0.0
    %157 = vmatprep.subr.mxu0 0.0
    %158 = vmatpush2.xpose.msra.mxu0 0.0
    %159 = vmatprep.subr.mxu0 0.0
    %160 = vmatpush2.xpose.msra.mxu0 0.0
    %161 = vmatprep.subr.mxu0 0.0
    %162 = vmatpush2.xpose.msra.mxu0 0.0
    %163 = vmatprep.subr.mxu0 0.0
    %164 = vmatpush2.xpose.msra.mxu0 0.0
    %165 = vmatprep.subr.mxu0 0.0
    %166 = vmatpush2.xpose.msra.mxu0 0.0
    %167 = vmatprep.subr.mxu0 0.0
    %168 = vmatpush2.xpose.msra.mxu0 0.0
    %169 = vmatprep.mubr.f32.mxu0 0.0
    %170 = vmatmul.mubr.f32.gmra.mxu0 %v100
    %v171 = vpop.f32.mrf.mxu0
    %v172 = vadd.f32 0.0, %v171
    %v173 = vpop.f32.mrf.mxu0
    %174 = vdwg.mxu0
    %v176 = vsel %vm98, %v95, 0
    %v179 = vsel %vm98, %v83, 0
    %181 = vmatprep.subr.mxu0 0.0
    %182 = vmatpush1.xpose.msra.mxu0 0.0
    %183 = vmatprep.subr.mxu0 0.0
    %184 = vmatpush1.xpose.msra.mxu0 0.0
    %185 = vmatprep.subr.mxu0 0.0
    %186 = vmatpush1.xpose.msra.mxu0 0.0
    %187 = vmatprep.subr.mxu0 0.0
    %188 = vmatpush1.xpose.msra.mxu0 0.0
    %189 = vmatprep.subr.mxu0 0.0
    %190 = vmatpush1.xpose.msra.mxu0 0.0
    %191 = vmatprep.subr.mxu0 0.0
    %192 = vmatpush1.xpose.msra.mxu0 0.0
    %193 = vmatprep.subr.mxu0 0.0
    %194 = vmatpush1.xpose.msra.mxu0 0.0
    %195 = vmatprep.subr.mxu0 0.0
    %196 = vmatpush1.xpose.msra.mxu0 0.0
    %197 = vmatprep.subr.mxu0 0.0
    %198 = vmatpush1.xpose.msra.mxu0 0.0
    %199 = vmatprep.subr.mxu0 0.0
    %200 = vmatpush1.xpose.msra.mxu0 0.0
    %201 = vmatprep.subr.mxu0 0.0
    %202 = vmatpush1.xpose.msra.mxu0 0.0
    %203 = vmatprep.subr.mxu0 0.0
    %204 = vmatpush1.xpose.msra.mxu0 0.0
    %205 = vmatprep.subr.mxu0 0.0
    %206 = vmatpush1.xpose.msra.mxu0 0.0
    %207 = vmatprep.subr.mxu0 0.0
    %208 = vmatpush1.xpose.msra.mxu0 0.0
    %209 = vmatprep.subr.mxu0 0.0
    %210 = vmatpush1.xpose.msra.mxu0 0.0
    %211 = vmatprep.subr.mxu0 0.0
    %212 = vmatpush1.xpose.msra.mxu0 %v179
    %213 = vmatprep.subr.mxu0 0.0
    %214 = vmatpush2.xpose.msra.mxu0 0.0
    %215 = vmatprep.subr.mxu0 0.0
    %216 = vmatpush2.xpose.msra.mxu0 0.0
    %217 = vmatprep.subr.mxu0 0.0
    %218 = vmatpush2.xpose.msra.mxu0 0.0
    %219 = vmatprep.subr.mxu0 0.0
    %220 = vmatpush2.xpose.msra.mxu0 0.0
    %221 = vmatprep.subr.mxu0 0.0
    %222 = vmatpush2.xpose.msra.mxu0 0.0
    %223 = vmatprep.subr.mxu0 0.0
    %224 = vmatpush2.xpose.msra.mxu0 0.0
    %225 = vmatprep.subr.mxu0 0.0
    %226 = vmatpush2.xpose.msra.mxu0 0.0
    %227 = vmatprep.subr.mxu0 0.0
    %228 = vmatpush2.xpose.msra.mxu0 0.0
    %229 = vmatprep.subr.mxu0 0.0
    %230 = vmatpush2.xpose.msra.mxu0 0.0
    %231 = vmatprep.subr.mxu0 0.0
    %232 = vmatpush2.xpose.msra.mxu0 0.0
    %233 = vmatprep.subr.mxu0 0.0
    %234 = vmatpush2.xpose.msra.mxu0 0.0
    %235 = vmatprep.subr.mxu0 0.0
    %236 = vmatpush2.xpose.msra.mxu0 0.0
    %237 = vmatprep.subr.mxu0 0.0
    %238 = vmatpush2.xpose.msra.mxu0 0.0
    %239 = vmatprep.subr.mxu0 0.0
    %240 = vmatpush2.xpose.msra.mxu0 0.0
    %241 = vmatprep.subr.mxu0 0.0
    %242 = vmatpush2.xpose.msra.mxu0 0.0
    %243 = vmatprep.subr.mxu0 0.0
    %244 = vmatpush2.xpose.msra.mxu0 0.0
    %245 = vmatprep.mubr.f32.mxu0 0.0
    %246 = vmatmul.mubr.f32.gmra.mxu0 %v176
    %v247 = vpop.f32.mrf.mxu0
    %v248 = vadd.f32 0.0, %v247
    %v249 = vpop.f32.mrf.mxu0
    %250 = vdwg.mxu0
    %v252 = vsel %vm98, %v96, 0
    %v255 = vsel %vm98, %v84, 0
    %257 = vmatprep.subr.mxu0 0.0
    %258 = vmatpush1.xpose.msra.mxu0 0.0
    %259 = vmatprep.subr.mxu0 0.0
    %260 = vmatpush1.xpose.msra.mxu0 0.0
    %261 = vmatprep.subr.mxu0 0.0
    %262 = vmatpush1.xpose.msra.mxu0 0.0
    %263 = vmatprep.subr.mxu0 0.0
    %264 = vmatpush1.xpose.msra.mxu0 0.0
    %265 = vmatprep.subr.mxu0 0.0
    %266 = vmatpush1.xpose.msra.mxu0 0.0
    %267 = vmatprep.subr.mxu0 0.0
    %268 = vmatpush1.xpose.msra.mxu0 0.0
    %269 = vmatprep.subr.mxu0 0.0
    %270 = vmatpush1.xpose.msra.mxu0 0.0
    %271 = vmatprep.subr.mxu0 0.0
    %272 = vmatpush1.xpose.msra.mxu0 0.0
    %273 = vmatprep.subr.mxu0 0.0
    %274 = vmatpush1.xpose.msra.mxu0 0.0
    %275 = vmatprep.subr.mxu0 0.0
    %276 = vmatpush1.xpose.msra.mxu0 0.0
    %277 = vmatprep.subr.mxu0 0.0
    %278 = vmatpush1.xpose.msra.mxu0 0.0
    %279 = vmatprep.subr.mxu0 0.0
    %280 = vmatpush1.xpose.msra.mxu0 0.0
    %281 = vmatprep.subr.mxu0 0.0
    %282 = vmatpush1.xpose.msra.mxu0 0.0
    %283 = vmatprep.subr.mxu0 0.0
    %284 = vmatpush1.xpose.msra.mxu0 0.0
    %285 = vmatprep.subr.mxu0 0.0
    %286 = vmatpush1.xpose.msra.mxu0 0.0
    %287 = vmatprep.subr.mxu0 0.0
    %288 = vmatpush1.xpose.msra.mxu0 %v255
    %289 = vmatprep.subr.mxu0 0.0
    %290 = vmatpush2.xpose.msra.mxu0 0.0
    %291 = vmatprep.subr.mxu0 0.0
    %292 = vmatpush2.xpose.msra.mxu0 0.0
    %293 = vmatprep.subr.mxu0 0.0
    %294 = vmatpush2.xpose.msra.mxu0 0.0
    %295 = vmatprep.subr.mxu0 0.0
    %296 = vmatpush2.xpose.msra.mxu0 0.0
    %297 = vmatprep.subr.mxu0 0.0
    %298 = vmatpush2.xpose.msra.mxu0 0.0
    %299 = vmatprep.subr.mxu0 0.0
    %300 = vmatpush2.xpose.msra.mxu0 0.0
    %301 = vmatprep.subr.mxu0 0.0
    %302 = vmatpush2.xpose.msra.mxu0 0.0
    %303 = vmatprep.subr.mxu0 0.0
    %304 = vmatpush2.xpose.msra.mxu0 0.0
    %305 = vmatprep.subr.mxu0 0.0
    %306 = vmatpush2.xpose.msra.mxu0 0.0
    %307 = vmatprep.subr.mxu0 0.0
    %308 = vmatpush2.xpose.msra.mxu0 0.0
    %309 = vmatprep.subr.mxu0 0.0
    %310 = vmatpush2.xpose.msra.mxu0 0.0
    %311 = vmatprep.subr.mxu0 0.0
    %312 = vmatpush2.xpose.msra.mxu0 0.0
    %313 = vmatprep.subr.mxu0 0.0
    %314 = vmatpush2.xpose.msra.mxu0 0.0
    %315 = vmatprep.subr.mxu0 0.0
    %316 = vmatpush2.xpose.msra.mxu0 0.0
    %317 = vmatprep.subr.mxu0 0.0
    %318 = vmatpush2.xpose.msra.mxu0 0.0
    %319 = vmatprep.subr.mxu0 0.0
    %320 = vmatpush2.xpose.msra.mxu0 0.0
    %321 = vmatprep.mubr.f32.mxu0 0.0
    %322 = vmatmul.mubr.f32.gmra.mxu0 %v252
    %v323 = vpop.f32.mrf.mxu0
    %v324 = vadd.f32 0.0, %v323
    %v325 = vpop.f32.mrf.mxu0
    %326 = vdwg.mxu0
    %v328 = vsel %vm98, %v97, 0
    %v331 = vsel %vm98, %v85, 0
    %333 = vmatprep.subr.mxu0 0.0
    %334 = vmatpush1.xpose.msra.mxu0 0.0
    %335 = vmatprep.subr.mxu0 0.0
    %336 = vmatpush1.xpose.msra.mxu0 0.0
    %337 = vmatprep.subr.mxu0 0.0
    %338 = vmatpush1.xpose.msra.mxu0 0.0
    %339 = vmatprep.subr.mxu0 0.0
    %340 = vmatpush1.xpose.msra.mxu0 0.0
    %341 = vmatprep.subr.mxu0 0.0
    %342 = vmatpush1.xpose.msra.mxu0 0.0
    %343 = vmatprep.subr.mxu0 0.0
    %344 = vmatpush1.xpose.msra.mxu0 0.0
    %345 = vmatprep.subr.mxu0 0.0
    %346 = vmatpush1.xpose.msra.mxu0 0.0
    %347 = vmatprep.subr.mxu0 0.0
    %348 = vmatpush1.xpose.msra.mxu0 0.0
    %349 = vmatprep.subr.mxu0 0.0
    %350 = vmatpush1.xpose.msra.mxu0 0.0
    %351 = vmatprep.subr.mxu0 0.0
    %352 = vmatpush1.xpose.msra.mxu0 0.0
    %353 = vmatprep.subr.mxu0 0.0
    %354 = vmatpush1.xpose.msra.mxu0 0.0
    %355 = vmatprep.subr.mxu0 0.0
    %356 = vmatpush1.xpose.msra.mxu0 0.0
    %357 = vmatprep.subr.mxu0 0.0
    %358 = vmatpush1.xpose.msra.mxu0 0.0
    %359 = vmatprep.subr.mxu0 0.0
    %360 = vmatpush1.xpose.msra.mxu0 0.0
    %361 = vmatprep.subr.mxu0 0.0
    %362 = vmatpush1.xpose.msra.mxu0 0.0
    %363 = vmatprep.subr.mxu0 0.0
    %364 = vmatpush1.xpose.msra.mxu0 %v331
    %365 = vmatprep.subr.mxu0 0.0
    %366 = vmatpush2.xpose.msra.mxu0 0.0
    %367 = vmatprep.subr.mxu0 0.0
    %368 = vmatpush2.xpose.msra.mxu0 0.0
    %369 = vmatprep.subr.mxu0 0.0
    %370 = vmatpush2.xpose.msra.mxu0 0.0
    %371 = vmatprep.subr.mxu0 0.0
    %372 = vmatpush2.xpose.msra.mxu0 0.0
    %373 = vmatprep.subr.mxu0 0.0
    %374 = vmatpush2.xpose.msra.mxu0 0.0
    %375 = vmatprep.subr.mxu0 0.0
    %376 = vmatpush2.xpose.msra.mxu0 0.0
    %377 = vmatprep.subr.mxu0 0.0
    %378 = vmatpush2.xpose.msra.mxu0 0.0
    %379 = vmatprep.subr.mxu0 0.0
    %380 = vmatpush2.xpose.msra.mxu0 0.0
    %381 = vmatprep.subr.mxu0 0.0
    %382 = vmatpush2.xpose.msra.mxu0 0.0
    %383 = vmatprep.subr.mxu0 0.0
    %384 = vmatpush2.xpose.msra.mxu0 0.0
    %385 = vmatprep.subr.mxu0 0.0
    %386 = vmatpush2.xpose.msra.mxu0 0.0
    %387 = vmatprep.subr.mxu0 0.0
    %388 = vmatpush2.xpose.msra.mxu0 0.0
    %389 = vmatprep.subr.mxu0 0.0
    %390 = vmatpush2.xpose.msra.mxu0 0.0
    %391 = vmatprep.subr.mxu0 0.0
    %392 = vmatpush2.xpose.msra.mxu0 0.0
    %393 = vmatprep.subr.mxu0 0.0
    %394 = vmatpush2.xpose.msra.mxu0 0.0
    %395 = vmatprep.subr.mxu0 0.0
    %396 = vmatpush2.xpose.msra.mxu0 0.0
    %397 = vmatprep.mubr.f32.mxu0 0.0
    %398 = vmatmul.mubr.f32.gmra.mxu0 %v328
    %v399 = vpop.f32.mrf.mxu0
    %v400 = vadd.f32 0.0, %v399
    %v401 = vpop.f32.mrf.mxu0
    %402 = vdwg.mxu0
    %vm403 = vnez %v90
    %vm404 = vnez %v91
    %vm405 = vnez %v92
    %vm406 = vnez %v93
    %v407 = vsel %vm403, 16843009, 0
    %v408 = vsel %vm404, 16843009, 0
    %v409 = vsel %vm405, 16843009, 0
    %v410 = vsel %vm406, 16843009, 0
    %v411 = vunpack.c.0.s8 %v407
    %v412 = vunpack.c.0.s8 %v408
    %v413 = vunpack.c.0.s8 %v409
    %v414 = vunpack.c.0.s8 %v410
    %vm415 = vcmp.ne.s32.totalorder %v411, 0
    %vm416 = vcmp.ne.s32.totalorder %v412, 0
    %vm417 = vcmp.ne.s32.totalorder %v413, 0
    %vm418 = vcmp.ne.s32.totalorder %v414, 0
    %v419 = vsel %vm415, -1e+09, %v172
    %v420 = vsel %vm416, -1e+09, %v248
    %v421 = vsel %vm417, -1e+09, %v324
    %v422 = vsel %vm418, -1e+09, %v400
    %vm423 = vcmask 64512
    %v424 = vsel %vm423, %v419, -inf
    %425 = vmax.xlane.f32.xlu0 %v424
    %v426 = vpop.xlane.xlu0 %425
    %v427 = vsel %vm423, %v420, -inf
    %428 = vmax.xlane.f32.xlu0 %v427
    %v429 = vpop.xlane.xlu0 %428
    %v430 = vsel %vm423, %v421, -inf
    %431 = vmax.xlane.f32.xlu0 %v430
    %v432 = vpop.xlane.xlu0 %431
    %v433 = vsel %vm423, %v422, -inf
    %434 = vmax.xlane.f32.xlu0 %v433
    %v435 = vpop.xlane.xlu0 %434
    %v436 = vsub.f32 %v419, %v426
    %v437 = vsub.f32 %v420, %v429
    %v438 = vsub.f32 %v421, %v432
    %v439 = vsub.f32 %v422, %v435
    %v440 = vmul.f32 %v436, 1.442695
    %v441 = vpow.pop %v440
    %v442 = vmul.f32 %v437, 1.442695
    %v443 = vpow.pop %v442
    %v444 = vmul.f32 %v438, 1.442695
    %v445 = vpow.pop %v444
    %v446 = vmul.f32 %v439, 1.442695
    %v447 = vpow.pop %v446
    %v448 = vsel %vm423, %v441, 0.0
    %449 = vadd.xlane.f32.xlu0 %v448
    %v450 = vpop.xlane.xlu0 %449
    %v451 = vsel %vm423, %v443, 0.0
    %452 = vadd.xlane.f32.xlu0 %v451
    %v453 = vpop.xlane.xlu0 %452
    %v454 = vsel %vm423, %v445, 0.0
    %455 = vadd.xlane.f32.xlu0 %v454
    %v456 = vpop.xlane.xlu0 %455
    %v457 = vsel %vm423, %v447, 0.0
    %458 = vadd.xlane.f32.xlu0 %v457
    %v459 = vpop.xlane.xlu0 %458
    %v460 = vrcp.pop %v450
    %v461 = vrcp.pop %v453
    %v462 = vrcp.pop %v456
    %v463 = vrcp.pop %v459
    %v464 = vmul.f32 %v441, %v460
    %v465 = vmul.f32 %v443, %v461
    %v466 = vmul.f32 %v445, %v462
    %v467 = vmul.f32 %v447, %v463
    %v469 = vsel %vm423, %v464, 0
    %471 = vmatprep.subr.mxu0 0.0
    %472 = vmatpush1.msra.mxu0 0.0
    %473 = vmatprep.subr.mxu0 0.0
    %474 = vmatpush1.msra.mxu0 0.0
    %475 = vmatprep.subr.mxu0 0.0
    %476 = vmatpush1.msra.mxu0 0.0
    %477 = vmatprep.subr.mxu0 0.0
    %478 = vmatpush1.msra.mxu0 0.0
    %479 = vmatprep.subr.mxu0 0.0
    %480 = vmatpush1.msra.mxu0 0.0
    %481 = vmatprep.subr.mxu0 0.0
    %482 = vmatpush1.msra.mxu0 0.0
    %483 = vmatprep.subr.mxu0 0.0
    %484 = vmatpush1.msra.mxu0 0.0
    %485 = vmatprep.subr.mxu0 0.0
    %486 = vmatpush1.msra.mxu0 0.0
    %487 = vmatprep.subr.mxu0 0.0
    %488 = vmatpush1.msra.mxu0 0.0
    %489 = vmatprep.subr.mxu0 0.0
    %490 = vmatpush1.msra.mxu0 0.0
    %491 = vmatprep.subr.mxu0 0.0
    %492 = vmatpush1.msra.mxu0 0.0
    %493 = vmatprep.subr.mxu0 0.0
    %494 = vmatpush1.msra.mxu0 0.0
    %495 = vmatprep.subr.mxu0 0.0
    %496 = vmatpush1.msra.mxu0 0.0
    %497 = vmatprep.subr.mxu0 0.0
    %498 = vmatpush1.msra.mxu0 0.0
    %499 = vmatprep.subr.mxu0 0.0
    %500 = vmatpush1.msra.mxu0 0.0
    %501 = vmatprep.subr.mxu0 0.0
    %502 = vmatpush1.msra.mxu0 %v86
    %503 = vmatprep.subr.mxu0 0.0
    %504 = vmatpush2.msra.mxu0 0.0
    %505 = vmatprep.subr.mxu0 0.0
    %506 = vmatpush2.msra.mxu0 0.0
    %507 = vmatprep.subr.mxu0 0.0
    %508 = vmatpush2.msra.mxu0 0.0
    %509 = vmatprep.subr.mxu0 0.0
    %510 = vmatpush2.msra.mxu0 0.0
    %511 = vmatprep.subr.mxu0 0.0
    %512 = vmatpush2.msra.mxu0 0.0
    %513 = vmatprep.subr.mxu0 0.0
    %514 = vmatpush2.msra.mxu0 0.0
    %515 = vmatprep.subr.mxu0 0.0
    %516 = vmatpush2.msra.mxu0 0.0
    %517 = vmatprep.subr.mxu0 0.0
    %518 = vmatpush2.msra.mxu0 0.0
    %519 = vmatprep.subr.mxu0 0.0
    %520 = vmatpush2.msra.mxu0 0.0
    %521 = vmatprep.subr.mxu0 0.0
    %522 = vmatpush2.msra.mxu0 0.0
    %523 = vmatprep.subr.mxu0 0.0
    %524 = vmatpush2.msra.mxu0 0.0
    %525 = vmatprep.subr.mxu0 0.0
    %526 = vmatpush2.msra.mxu0 0.0
    %527 = vmatprep.subr.mxu0 0.0
    %528 = vmatpush2.msra.mxu0 0.0
    %529 = vmatprep.subr.mxu0 0.0
    %530 = vmatpush2.msra.mxu0 0.0
    %531 = vmatprep.subr.mxu0 0.0
    %532 = vmatpush2.msra.mxu0 0.0
    %533 = vmatprep.subr.mxu0 0.0
    %534 = vmatpush2.msra.mxu0 0.0
    %535 = vmatprep.mubr.f32.mxu0 0.0
    %536 = vmatmul.mubr.f32.gmra.mxu0 %v469
    %v537 = vpop.f32.mrf.mxu0
    %v538 = vadd.f32 0.0, %v537
    %v539 = vpop.f32.mrf.mxu0
    %540 = vdwg.mxu0
    %v542 = vsel %vm423, %v465, 0
    %544 = vmatprep.subr.mxu0 0.0
    %545 = vmatpush1.msra.mxu0 0.0
    %546 = vmatprep.subr.mxu0 0.0
    %547 = vmatpush1.msra.mxu0 0.0
    %548 = vmatprep.subr.mxu0 0.0
    %549 = vmatpush1.msra.mxu0 0.0
    %550 = vmatprep.subr.mxu0 0.0
    %551 = vmatpush1.msra.mxu0 0.0
    %552 = vmatprep.subr.mxu0 0.0
    %553 = vmatpush1.msra.mxu0 0.0
    %554 = vmatprep.subr.mxu0 0.0
    %555 = vmatpush1.msra.mxu0 0.0
    %556 = vmatprep.subr.mxu0 0.0
    %557 = vmatpush1.msra.mxu0 0.0
    %558 = vmatprep.subr.mxu0 0.0
    %559 = vmatpush1.msra.mxu0 0.0
    %560 = vmatprep.subr.mxu0 0.0
    %561 = vmatpush1.msra.mxu0 0.0
    %562 = vmatprep.subr.mxu0 0.0
    %563 = vmatpush1.msra.mxu0 0.0
    %564 = vmatprep.subr.mxu0 0.0
    %565 = vmatpush1.msra.mxu0 0.0
    %566 = vmatprep.subr.mxu0 0.0
    %567 = vmatpush1.msra.mxu0 0.0
    %568 = vmatprep.subr.mxu0 0.0
    %569 = vmatpush1.msra.mxu0 0.0
    %570 = vmatprep.subr.mxu0 0.0
    %571 = vmatpush1.msra.mxu0 0.0
    %572 = vmatprep.subr.mxu0 0.0
    %573 = vmatpush1.msra.mxu0 0.0
    %574 = vmatprep.subr.mxu0 0.0
    %575 = vmatpush1.msra.mxu0 %v87
    %576 = vmatprep.subr.mxu0 0.0
    %577 = vmatpush2.msra.mxu0 0.0
    %578 = vmatprep.subr.mxu0 0.0
    %579 = vmatpush2.msra.mxu0 0.0
    %580 = vmatprep.subr.mxu0 0.0
    %581 = vmatpush2.msra.mxu0 0.0
    %582 = vmatprep.subr.mxu0 0.0
    %583 = vmatpush2.msra.mxu0 0.0
    %584 = vmatprep.subr.mxu0 0.0
    %585 = vmatpush2.msra.mxu0 0.0
    %586 = vmatprep.subr.mxu0 0.0
    %587 = vmatpush2.msra.mxu0 0.0
    %588 = vmatprep.subr.mxu0 0.0
    %589 = vmatpush2.msra.mxu0 0.0
    %590 = vmatprep.subr.mxu0 0.0
    %591 = vmatpush2.msra.mxu0 0.0
    %592 = vmatprep.subr.mxu0 0.0
    %593 = vmatpush2.msra.mxu0 0.0
    %594 = vmatprep.subr.mxu0 0.0
    %595 = vmatpush2.msra.mxu0 0.0
    %596 = vmatprep.subr.mxu0 0.0
    %597 = vmatpush2.msra.mxu0 0.0
    %598 = vmatprep.subr.mxu0 0.0
    %599 = vmatpush2.msra.mxu0 0.0
    %600 = vmatprep.subr.mxu0 0.0
    %601 = vmatpush2.msra.mxu0 0.0
    %602 = vmatprep.subr.mxu0 0.0
    %603 = vmatpush2.msra.mxu0 0.0
    %604 = vmatprep.subr.mxu0 0.0
    %605 = vmatpush2.msra.mxu0 0.0
    %606 = vmatprep.subr.mxu0 0.0
    %607 = vmatpush2.msra.mxu0 0.0
    %608 = vmatprep.mubr.f32.mxu0 0.0
    %609 = vmatmul.mubr.f32.gmra.mxu0 %v542
    %v610 = vpop.f32.mrf.mxu0
    %v611 = vadd.f32 0.0, %v610
    %v612 = vpop.f32.mrf.mxu0
    %613 = vdwg.mxu0
    %v615 = vsel %vm423, %v466, 0
    %617 = vmatprep.subr.mxu0 0.0
    %618 = vmatpush1.msra.mxu0 0.0
    %619 = vmatprep.subr.mxu0 0.0
    %620 = vmatpush1.msra.mxu0 0.0
    %621 = vmatprep.subr.mxu0 0.0
    %622 = vmatpush1.msra.mxu0 0.0
    %623 = vmatprep.subr.mxu0 0.0
    %624 = vmatpush1.msra.mxu0 0.0
    %625 = vmatprep.subr.mxu0 0.0
    %626 = vmatpush1.msra.mxu0 0.0
    %627 = vmatprep.subr.mxu0 0.0
    %628 = vmatpush1.msra.mxu0 0.0
    %629 = vmatprep.subr.mxu0 0.0
    %630 = vmatpush1.msra.mxu0 0.0
    %631 = vmatprep.subr.mxu0 0.0
    %632 = vmatpush1.msra.mxu0 0.0
    %633 = vmatprep.subr.mxu0 0.0
    %634 = vmatpush1.msra.mxu0 0.0
    %635 = vmatprep.subr.mxu0 0.0
    %636 = vmatpush1.msra.mxu0 0.0
    %637 = vmatprep.subr.mxu0 0.0
    %638 = vmatpush1.msra.mxu0 0.0
    %639 = vmatprep.subr.mxu0 0.0
    %640 = vmatpush1.msra.mxu0 0.0
    %641 = vmatprep.subr.mxu0 0.0
    %642 = vmatpush1.msra.mxu0 0.0
    %643 = vmatprep.subr.mxu0 0.0
    %644 = vmatpush1.msra.mxu0 0.0
    %645 = vmatprep.subr.mxu0 0.0
    %646 = vmatpush1.msra.mxu0 0.0
    %647 = vmatprep.subr.mxu0 0.0
    %648 = vmatpush1.msra.mxu0 %v88
    %649 = vmatprep.subr.mxu0 0.0
    %650 = vmatpush2.msra.mxu0 0.0
    %651 = vmatprep.subr.mxu0 0.0
    %652 = vmatpush2.msra.mxu0 0.0
    %653 = vmatprep.subr.mxu0 0.0
    %654 = vmatpush2.msra.mxu0 0.0
    %655 = vmatprep.subr.mxu0 0.0
    %656 = vmatpush2.msra.mxu0 0.0
    %657 = vmatprep.subr.mxu0 0.0
    %658 = vmatpush2.msra.mxu0 0.0
    %659 = vmatprep.subr.mxu0 0.0
    %660 = vmatpush2.msra.mxu0 0.0
    %661 = vmatprep.subr.mxu0 0.0
    %662 = vmatpush2.msra.mxu0 0.0
    %663 = vmatprep.subr.mxu0 0.0
    %664 = vmatpush2.msra.mxu0 0.0
    %665 = vmatprep.subr.mxu0 0.0
    %666 = vmatpush2.msra.mxu0 0.0
    %667 = vmatprep.subr.mxu0 0.0
    %668 = vmatpush2.msra.mxu0 0.0
    %669 = vmatprep.subr.mxu0 0.0
    %670 = vmatpush2.msra.mxu0 0.0
    %671 = vmatprep.subr.mxu0 0.0
    %672 = vmatpush2.msra.mxu0 0.0
    %673 = vmatprep.subr.mxu0 0.0
    %674 = vmatpush2.msra.mxu0 0.0
    %675 = vmatprep.subr.mxu0 0.0
    %676 = vmatpush2.msra.mxu0 0.0
    %677 = vmatprep.subr.mxu0 0.0
    %678 = vmatpush2.msra.mxu0 0.0
    %679 = vmatprep.subr.mxu0 0.0
    %680 = vmatpush2.msra.mxu0 0.0
    %681 = vmatprep.mubr.f32.mxu0 0.0
    %682 = vmatmul.mubr.f32.gmra.mxu0 %v615
    %v683 = vpop.f32.mrf.mxu0
    %v684 = vadd.f32 0.0, %v683
    %v685 = vpop.f32.mrf.mxu0
    %686 = vdwg.mxu0
    %v688 = vsel %vm423, %v467, 0
    %690 = vmatprep.subr.mxu0 0.0
    %691 = vmatpush1.msra.mxu0 0.0
    %692 = vmatprep.subr.mxu0 0.0
    %693 = vmatpush1.msra.mxu0 0.0
    %694 = vmatprep.subr.mxu0 0.0
    %695 = vmatpush1.msra.mxu0 0.0
    %696 = vmatprep.subr.mxu0 0.0
    %697 = vmatpush1.msra.mxu0 0.0
    %698 = vmatprep.subr.mxu0 0.0
    %699 = vmatpush1.msra.mxu0 0.0
    %700 = vmatprep.subr.mxu0 0.0
    %701 = vmatpush1.msra.mxu0 0.0
    %702 = vmatprep.subr.mxu0 0.0
    %703 = vmatpush1.msra.mxu0 0.0
    %704 = vmatprep.subr.mxu0 0.0
    %705 = vmatpush1.msra.mxu0 0.0
    %706 = vmatprep.subr.mxu0 0.0
    %707 = vmatpush1.msra.mxu0 0.0
    %708 = vmatprep.subr.mxu0 0.0
    %709 = vmatpush1.msra.mxu0 0.0
    %710 = vmatprep.subr.mxu0 0.0
    %711 = vmatpush1.msra.mxu0 0.0
    %712 = vmatprep.subr.mxu0 0.0
    %713 = vmatpush1.msra.mxu0 0.0
    %714 = vmatprep.subr.mxu0 0.0
    %715 = vmatpush1.msra.mxu0 0.0
    %716 = vmatprep.subr.mxu0 0.0
    %717 = vmatpush1.msra.mxu0 0.0
    %718 = vmatprep.subr.mxu0 0.0
    %719 = vmatpush1.msra.mxu0 0.0
    %720 = vmatprep.subr.mxu0 0.0
    %721 = vmatpush1.msra.mxu0 %v89
    %722 = vmatprep.subr.mxu0 0.0
    %723 = vmatpush2.msra.mxu0 0.0
    %724 = vmatprep.subr.mxu0 0.0
    %725 = vmatpush2.msra.mxu0 0.0
    %726 = vmatprep.subr.mxu0 0.0
    %727 = vmatpush2.msra.mxu0 0.0
    %728 = vmatprep.subr.mxu0 0.0
    %729 = vmatpush2.msra.mxu0 0.0
    %730 = vmatprep.subr.mxu0 0.0
    %731 = vmatpush2.msra.mxu0 0.0
    %732 = vmatprep.subr.mxu0 0.0
    %733 = vmatpush2.msra.mxu0 0.0
    %734 = vmatprep.subr.mxu0 0.0
    %735 = vmatpush2.msra.mxu0 0.0
    %736 = vmatprep.subr.mxu0 0.0
    %737 = vmatpush2.msra.mxu0 0.0
    %738 = vmatprep.subr.mxu0 0.0
    %739 = vmatpush2.msra.mxu0 0.0
    %740 = vmatprep.subr.mxu0 0.0
    %741 = vmatpush2.msra.mxu0 0.0
    %742 = vmatprep.subr.mxu0 0.0
    %743 = vmatpush2.msra.mxu0 0.0
    %744 = vmatprep.subr.mxu0 0.0
    %745 = vmatpush2.msra.mxu0 0.0
    %746 = vmatprep.subr.mxu0 0.0
    %747 = vmatpush2.msra.mxu0 0.0
    %748 = vmatprep.subr.mxu0 0.0
    %749 = vmatpush2.msra.mxu0 0.0
    %750 = vmatprep.subr.mxu0 0.0
    %751 = vmatpush2.msra.mxu0 0.0
    %752 = vmatprep.subr.mxu0 0.0
    %753 = vmatpush2.msra.mxu0 0.0
    %754 = vmatprep.mubr.f32.mxu0 0.0
    %755 = vmatmul.mubr.f32.gmra.mxu0 %v688
    %v756 = vpop.f32.mrf.mxu0
    %v757 = vadd.f32 0.0, %v756
    %v758 = vpop.f32.mrf.mxu0
    %759 = vdwg.mxu0
    %760 = vst.msk [vmem:[#allocation10] sm:$0xff] %vm98, %v538
    %761 = vst.msk [vmem:[#allocation10 + $0x8] sm:$0xff] %vm98, %v611
    %762 = vst.msk [vmem:[#allocation10 + $0x10] sm:$0xff] %vm98, %v684
    %763 = vst.msk [vmem:[#allocation10 + $0x18] sm:$0xff] %vm98, %v757
    %764 = vst.msk [vmem:[#allocation11] sm:$0xff] %vm423, %v464
    %765 = vst.msk [vmem:[#allocation11 + $0x8] sm:$0xff] %vm423, %v465
    %766 = vst.msk [vmem:[#allocation11 + $0x10] sm:$0xff] %vm423, %v466
    %767 = vst.msk [vmem:[#allocation11 + $0x18] sm:$0xff] %vm423, %v467
    // Predicated region
    $region34: #{tpu_custom_call.1} parent=1 // pred_check
      _
    $region35: #{tpu_custom_call.1} parent=1 // pred_check_branch
      %769 = sbr.rel (0) target = $region37
    $region36: #{tpu_custom_call.1} parent=1 // pred_region
      %s771 = ssub.s32 512, 512
      %772 = vsyncadd [#allocation4], %s771
      %s773 = sshll.u32 [#allocation10], 4
      %s774 = int_to_ptr.vmem [resolvable:$true] %s773
      %779 = dma.vmem_to_hbm [thread:$0]  %s774, 512, %s4, [#allocation4], 128, 128, 8
    $region37: #{tpu_custom_call.1} parent=1 // pred_fallthru
      _
    // Predicated region
    $region38: #{tpu_custom_call.1} parent=1 // pred_check
      _
    $region39: #{tpu_custom_call.1} parent=1 // pred_check_branch
      %781 = sbr.rel (0) target = $region41
    $region40: #{tpu_custom_call.1} parent=1 // pred_region
      %s783 = ssub.s32 512, 512
      %784 = vsyncadd [#allocation12], %s783
      %s785 = sshll.u32 [#allocation11], 4
      %s786 = int_to_ptr.vmem [resolvable:$true] %s785
      %791 = dma.vmem_to_hbm [thread:$0]  %s786, 512, %s5, [#allocation12], 128, 128, 8
    $region41: #{tpu_custom_call.1} parent=1 // pred_fallthru
      _
    // Predicated region
    $region42: #{tpu_custom_call.1} parent=1 // pred_check
      _
    $region43: #{tpu_custom_call.1} parent=1 // pred_check_branch
      %793 = sbr.rel (0) target = $region45
    $region44: #{tpu_custom_call.1} parent=1 // pred_region
      %794 = dma.done [#allocation4], 512
    $region45: #{tpu_custom_call.1} parent=1 // pred_fallthru
      _
    // Predicated region
    $region46: #{tpu_custom_call.1} parent=1 // pred_check
      _
    $region47: #{tpu_custom_call.1} parent=1 // pred_check_branch
      %796 = sbr.rel (0) target = $region49
    $region48: #{tpu_custom_call.1} parent=1 // pred_region
      %797 = dma.done [#allocation12], 512
    $region49: #{tpu_custom_call.1} parent=1 // pred_fallthru
      _
    %798 = vsyncpa [#allocation3], 1
    %799 = vsyncpa [#allocation6], 1
    %800 = vsyncpa [#allocation9], 1
    %801 = vsyncpa [#allocation4], 1
    %802 = vsyncpa [#allocation12], 1

</llo_original>
